<compile_context>
chip_gen: v7x
topology: tpu7x:2x2x1
jax: 0.10.0
libtpu: 0.0.40
codegen_flags: <defaults>
</compile_context>

<pallas_src>
import functools

import jax
import jax.numpy as jnp
from jax.experimental import pallas as pl
from jax.experimental.pallas import tpu as pltpu

# Sobel taps (cross-correlation, as in F.conv2d) -- used by the pure-JAX ref.
_KX = ((-1.0, 0.0, 1.0),
       (-2.0, 0.0, 2.0),
       (-1.0, 0.0, 1.0))
_KY = ((1.0, 2.0, 1.0),
       (0.0, 0.0, 0.0),
       (-1.0, -2.0, -1.0))


def _round_up(x, m):
    return (x + m - 1) // m * m


def _vmem_limits():
    """(scoped vmem_limit_bytes, budget for tb sizing), generation-aware."""
    try:
        phys = pltpu.get_tpu_info().vmem_capacity_bytes
    except Exception:
        phys = 128 * 1024 * 1024
    limit = min(48 * 1024 * 1024, (phys * 5) // 8)   # 40 MiB on v7x, 48 MiB v5e/v6e
    budget = (limit * 2) // 3
    return limit, budget


def _pick_batch_tile(num_images, hp, wp, itemsize, budget_bytes, max_tb=8):
    """Images per grid step.

    Budget counts the double-buffered input blocks (3 arrays x 2 buffers) per
    image plus a fixed allowance for the f32 roll/diff temporaries of the one
    image live inside the fori_loop body (the loop bounds those live ranges,
    so they do not scale with tb).
    """
    block_bytes_per_image = hp * wp * itemsize * 3 * 2
    temporaries_bytes = hp * wp * 4 * 12
    avail = max(budget_bytes - temporaries_bytes, block_bytes_per_image)
    tb = max(1, min(num_images, max_tb, avail // block_bytes_per_image))
    # Keep >=2 grid steps so the 'parallel' axis can shard across v7x's two
    # TensorCores and input DMA overlaps compute.
    tb = min(tb, max(1, num_images // 2))
    while num_images % tb:       # keep the grid exact
        tb -= 1
    return tb


def _taylor_partials_kernel(inp_ref, res_ref, gmap_ref,
                            l1_ref, g1_ref, g2_ref, *, h_img, w_img):
    """Per-grid-step partial sums for the three L1 terms of Taylor_loss.

    inp_ref / res_ref / gmap_ref: (TB, Hp, Wp) blocks, Hp % 8 == 0, Wp % 128 == 0.
    l1_ref / g1_ref / g2_ref:     (1, 1, Wp) lane-dense partial-sum rows.
    h_img / w_img: the real (unpadded) image height / width.
    """
    tb, hp, wp = inp_ref.shape

    # Emit border selects only where alignment gave us no natural zero pad.
    mask_rows = (hp == h_img)            # no zero pad row below the image
    mask_cols = (wp == w_img)            # no zero pad column right of the image
    need_vmask = (hp > h_img) or (wp > w_img)

    row = col = None
    if mask_rows or hp > h_img:
        row = jax.lax.broadcasted_iota(jnp.int32, (hp, wp), 0)
    if mask_cols or wp > w_img:
        col = jax.lax.broadcasted_iota(jnp.int32, (hp, wp), 1)

    vmask = None
    if need_vmask:
        valid = None
        if hp > h_img:
            valid = row < h_img
        if wp > w_img:
            c = col < w_img
            valid = c if valid is None else (valid & c)
        vmask = valid.astype(jnp.float32)

    def sobel(x):
        # Separable 3x3 Sobel via XLU rolls.  Where a zero pad row/column is
        # guaranteed, the wrapped-in values are already zero (== conv2d
        # padding=1), so no select is needed at that border.
        x_up = pltpu.roll(x, shift=1, axis=0)          # x[i-1, j]
        x_dn = pltpu.roll(x, shift=hp - 1, axis=0)     # x[i+1, j]
        if mask_rows:
            x_up = jnp.where(row > 0, x_up, 0.0)
            x_dn = jnp.where(row < hp - 1, x_dn, 0.0)
        v_s = x_up + x + x + x_dn                      # [1, 2, 1] column filter
        v_d = x_up - x_dn                              # [1, 0, -1] column filter
        vs_l = pltpu.roll(v_s, shift=1, axis=1)        # v_s[i, j-1]
        vs_r = pltpu.roll(v_s, shift=wp - 1, axis=1)   # v_s[i, j+1]
        vd_l = pltpu.roll(v_d, shift=1, axis=1)
        vd_r = pltpu.roll(v_d, shift=wp - 1, axis=1)
        if mask_cols:
            left_ok = col > 0
            right_ok = col < wp - 1
            vs_l = jnp.where(left_ok, vs_l, 0.0)
            vs_r = jnp.where(right_ok, vs_r, 0.0)
            vd_l = jnp.where(left_ok, vd_l, 0.0)
            vd_r = jnp.where(right_ok, vd_r, 0.0)
        g = jnp.abs(vs_r - vs_l) + jnp.abs(vd_l + v_d + v_d + vd_r)
        if vmask is not None:
            g = g * vmask            # zero the garbage produced in the pad region
        return g

    def body(b, carry):
        s_l1, s_g1, s_g2 = carry
        x = inp_ref[b].astype(jnp.float32)
        r = res_ref[b].astype(jnp.float32)
        gm = gmap_ref[b].astype(jnp.float32)
        ga = sobel(x)
        gb = sobel(r)
        # Pad regions contribute zero to every term (inputs and grad_map are
        # zero-padded; ga/gb are vmask-zeroed), so plain full-block sums are exact.
        s_l1 = s_l1 + jnp.sum(jnp.abs(x - r), axis=0, keepdims=True)
        s_g1 = s_g1 + jnp.sum(jnp.abs(ga - gb), axis=0, keepdims=True)
        s_g2 = s_g2 + jnp.sum(jnp.abs(ga - gm), axis=0, keepdims=True)
        return s_l1, s_g1, s_g2

    init = (jnp.zeros((1, wp), jnp.float32),
            jnp.zeros((1, wp), jnp.float32),
            jnp.zeros((1, wp), jnp.float32))
    if tb == 1:
        s_l1, s_g1, s_g2 = body(0, init)
    else:
        s_l1, s_g1, s_g2 = jax.lax.fori_loop(0, tb, body, init)

    l1_ref[0] = s_l1
    g1_ref[0] = s_g1
    g2_ref[0] = s_g2


@jax.jit
def taylor_loss(input_img, result_img, gd):
    """JAX/Pallas equivalent of Taylor_loss.forward.

    input_img, result_img: (N, C, H, W) with C == 1 (the module's Sobel conv
    weight is (1, 1, 3, 3)).  gd: sequence of (N, C, H, W) maps; gd[0] is
    skipped exactly like the PyTorch loop `for i in range(1, len(gd))`.
    Returns (loss_L1, loss_g, loss_L1 + loss_g).
    """
    N, C, H, W = input_img.shape
    if C != 1:
        raise ValueError("Taylor_loss requires C == 1 (Sobel weight is (1,1,3,3)).")
    M = N * C

    # grad_map = elementwise max over gd[1:], floored at 0 (zeros init).
    grad_map = jnp.zeros_like(result_img)
    for g in gd[1:]:
        grad_map = jnp.maximum(grad_map, g)

    itemsize = jnp.dtype(input_img.dtype).itemsize
    sub = 8 * max(1, 4 // itemsize)        # 8 sublanes f32, 16 bf16, 32 int8
    Hp = _round_up(H, sub)
    Wp = _round_up(W, 128)

    def prep(a):
        a = a.reshape(M, H, W)
        if (Hp, Wp) != (H, W):
            a = jnp.pad(a, ((0, 0), (0, Hp - H), (0, Wp - W)))
        return a

    x_in, x_res, x_gm = prep(input_img), prep(result_img), prep(grad_map)

    vmem_limit, vmem_budget = _vmem_limits()
    tb = _pick_batch_tile(M, Hp, Wp, itemsize, vmem_budget)
    G = M // tb

    # TODO(synk): for very large frames (Hp*Wp*f32 blocks + temporaries > the
    # VMEM budget, e.g. 4K on v7x's 64 MiB) add a second grid axis over row
    # strips with a 1-row halo instead of whole-image blocks.
    kernel = functools.partial(_taylor_partials_kernel, h_img=H, w_img=W)
    p_l1, p_g1, p_g2 = pl.pallas_call(
        kernel,
        out_shape=tuple(jax.ShapeDtypeStruct((G, 1, Wp), jnp.float32)
                        for _ in range(3)),
        grid_spec=pltpu.PrefetchScalarGridSpec(
            num_scalar_prefetch=0,
            grid=(G,),
            in_specs=[pl.BlockSpec((tb, Hp, Wp), lambda i: (i, 0, 0))
                      for _ in range(3)],
            out_specs=[pl.BlockSpec((1, 1, Wp), lambda i: (i, 0, 0))
                       for _ in range(3)],
        ),
        compiler_params=pltpu.CompilerParams(
            dimension_semantics=("parallel",),
            vmem_limit_bytes=vmem_limit,
        ),
    )(x_in, x_res, x_gm)

    denom = jnp.float32(M * H * W)
    loss_l1 = jnp.sum(p_l1) / denom
    loss_g1 = jnp.sum(p_g1) / denom
    loss_g2 = jnp.sum(p_g2) / denom
    loss_g = loss_g1 + 0.3 * loss_g2
    return loss_l1, loss_g, loss_l1 + loss_g


# ----------------------------- pure-JAX reference -----------------------------
def _sobelxy_ref(x):
    kx = jnp.array(_KX, jnp.float32).reshape(1, 1, 3, 3)
    ky = jnp.array(_KY, jnp.float32).reshape(1, 1, 3, 3)
    dn = jax.lax.conv_dimension_numbers(x.shape, kx.shape, ("NCHW", "OIHW", "NCHW"))
    xf = x.astype(jnp.float32)
    sx = jax.lax.conv_general_dilated(xf, kx, (1, 1), ((1, 1), (1, 1)),
                                      dimension_numbers=dn)
    sy = jax.lax.conv_general_dilated(xf, ky, (1, 1), ((1, 1), (1, 1)),
                                      dimension_numbers=dn)
    return jnp.abs(sx) + jnp.abs(sy)


def _taylor_loss_ref(inp, res, gd):
    loss_l1 = jnp.mean(jnp.abs(inp - res))
    ga = _sobelxy_ref(inp[:, :1])
    gb = _sobelxy_ref(res[:, :1])
    loss_g1 = jnp.mean(jnp.abs(ga - gb))
    gm = jnp.zeros_like(res)
    for g in gd[1:]:
        gm = jnp.maximum(gm, g)
    loss_g2 = jnp.mean(jnp.abs(_sobelxy_ref(inp) - gm))
    loss_g = loss_g1 + 0.3 * loss_g2
    return loss_l1, loss_g, loss_l1 + loss_g


if __name__ == "__main__":
    root = jax.random.PRNGKey(0)
    # Cover all static border-handling paths:
    #   (16,16): natural column pad, row border masks
    #   (12,128): natural row pad, column border masks
    #   (8,128):  fully aligned, both border masks, no pad at all
    configs = [
        (2, 1, 16, 16, 3),
        (3, 1, 12, 128, 2),
        (2, 1, 8, 128, 4),
    ]
    for idx, (N, C, H, W, n_gd) in enumerate(configs):
        key = jax.random.fold_in(root, idx)
        k1, k2, k3 = jax.random.split(key, 3)
        inp = jax.random.normal(k1, (N, C, H, W), dtype=jnp.float32)
        res = jax.random.normal(k2, (N, C, H, W), dtype=jnp.float32)
        gd = list(jax.random.uniform(k3, (n_gd, N, C, H, W), dtype=jnp.float32))

        out = jax.block_until_ready(taylor_loss(inp, res, gd))
        ref = _taylor_loss_ref(inp, res, gd)
        for o, r in zip(out, ref):
            assert jnp.allclose(o, r, atol=2e-5, rtol=2e-5), (idx, o, r)

    print("KERNEL_OK")
</pallas_src>

<mosaic_0001>
module attributes {stable_mosaic.version = 11 : i64} {
  func.func @_taylor_partials_kernel(%arg0: i32, %arg1: memref<1x16x128xf32, #tpu.memory_space<vmem>>, %arg2: memref<1x16x128xf32, #tpu.memory_space<vmem>>, %arg3: memref<1x16x128xf32, #tpu.memory_space<vmem>>, %arg4: memref<1x1x128xf32, #tpu.memory_space<vmem>>, %arg5: memref<1x1x128xf32, #tpu.memory_space<vmem>>, %arg6: memref<1x1x128xf32, #tpu.memory_space<vmem>>) attributes {dimension_semantics = [#tpu.dimension_semantics<parallel>], iteration_bounds = array<i64: 2>, scalar_prefetch = 0 : i64, scratch_operands = 0 : i64, tpu.core_type = #tpu.core_type<tc>, window_params = [{transform_indices = @transform_0, window_bounds = array<i64: 1, 16, 128>}, {transform_indices = @transform_1, window_bounds = array<i64: 1, 16, 128>}, {transform_indices = @transform_2, window_bounds = array<i64: 1, 16, 128>}, {transform_indices = @transform_3, window_bounds = array<i64: 1, 1, 128>}, {transform_indices = @transform_4, window_bounds = array<i64: 1, 1, 128>}, {transform_indices = @transform_5, window_bounds = array<i64: 1, 1, 128>}]} {
    %0 = tpu.iota {dimensions = array<i32: 0>} : vector<16x128xi32>
    %1 = tpu.iota {dimensions = array<i32: 1>} : vector<16x128xi32>
    %c16_i32 = arith.constant 16 : i32
    %2 = vector.broadcast %c16_i32 : i32 to vector<16x128xi32>
    %3 = arith.cmpi slt, %1, %2 : vector<16x128xi32>
    %4 = arith.extui %3 : vector<16x128xi1> to vector<16x128xi32>
    %5 = arith.sitofp %4 : vector<16x128xi32> to vector<16x128xf32>
    %cst = arith.constant 0.000000e+00 : f32
    %6 = vector.broadcast %cst : f32 to vector<1x128xf32>
    %cst_0 = arith.constant 0.000000e+00 : f32
    %7 = vector.broadcast %cst_0 : f32 to vector<1x128xf32>
    %cst_1 = arith.constant 0.000000e+00 : f32
    %8 = vector.broadcast %cst_1 : f32 to vector<1x128xf32>
    %c0 = arith.constant 0 : index
    %c0_2 = arith.constant 0 : index
    %c0_3 = arith.constant 0 : index
    %9 = vector.load %arg1[%c0, %c0_2, %c0_3] : memref<1x16x128xf32, #tpu.memory_space<vmem>>, vector<1x16x128xf32>
    %10 = vector.shape_cast %9 : vector<1x16x128xf32> to vector<16x128xf32>
    %c0_4 = arith.constant 0 : index
    %c0_5 = arith.constant 0 : index
    %c0_6 = arith.constant 0 : index
    %11 = vector.load %arg2[%c0_4, %c0_5, %c0_6] : memref<1x16x128xf32, #tpu.memory_space<vmem>>, vector<1x16x128xf32>
    %12 = vector.shape_cast %11 : vector<1x16x128xf32> to vector<16x128xf32>
    %c0_7 = arith.constant 0 : index
    %c0_8 = arith.constant 0 : index
    %c0_9 = arith.constant 0 : index
    %13 = vector.load %arg3[%c0_7, %c0_8, %c0_9] : memref<1x16x128xf32, #tpu.memory_space<vmem>>, vector<1x16x128xf32>
    %14 = vector.shape_cast %13 : vector<1x16x128xf32> to vector<16x128xf32>
    %c1_i32 = arith.constant 1 : i32
    %15 = tpu.dynamic_rotate %10 by %c1_i32 dim 0 : vector<16x128xf32>, i32 -> vector<16x128xf32>
    %c15_i32 = arith.constant 15 : i32
    %16 = tpu.dynamic_rotate %10 by %c15_i32 dim 0 : vector<16x128xf32>, i32 -> vector<16x128xf32>
    %c0_i32 = arith.constant 0 : i32
    %17 = vector.broadcast %c0_i32 : i32 to vector<16x128xi32>
    %18 = arith.cmpi sgt, %0, %17 : vector<16x128xi32>
    %cst_10 = arith.constant 0.000000e+00 : f32
    %19 = vector.broadcast %cst_10 : f32 to vector<16x128xf32>
    %20 = arith.select %18, %15, %19 : vector<16x128xi1>, vector<16x128xf32>
    %c15_i32_11 = arith.constant 15 : i32
    %21 = vector.broadcast %c15_i32_11 : i32 to vector<16x128xi32>
    %22 = arith.cmpi slt, %0, %21 : vector<16x128xi32>
    %cst_12 = arith.constant 0.000000e+00 : f32
    %23 = vector.broadcast %cst_12 : f32 to vector<16x128xf32>
    %24 = arith.select %22, %16, %23 : vector<16x128xi1>, vector<16x128xf32>
    %25 = arith.addf %20, %10 : vector<16x128xf32>
    %26 = arith.addf %25, %10 : vector<16x128xf32>
    %27 = arith.addf %26, %24 : vector<16x128xf32>
    %28 = arith.subf %20, %24 : vector<16x128xf32>
    %c1_i32_13 = arith.constant 1 : i32
    %29 = tpu.dynamic_rotate %27 by %c1_i32_13 dim 1 : vector<16x128xf32>, i32 -> vector<16x128xf32>
    %c127_i32 = arith.constant 127 : i32
    %30 = tpu.dynamic_rotate %27 by %c127_i32 dim 1 : vector<16x128xf32>, i32 -> vector<16x128xf32>
    %c1_i32_14 = arith.constant 1 : i32
    %31 = tpu.dynamic_rotate %28 by %c1_i32_14 dim 1 : vector<16x128xf32>, i32 -> vector<16x128xf32>
    %c127_i32_15 = arith.constant 127 : i32
    %32 = tpu.dynamic_rotate %28 by %c127_i32_15 dim 1 : vector<16x128xf32>, i32 -> vector<16x128xf32>
    %33 = arith.subf %30, %29 : vector<16x128xf32>
    %34 = math.absf %33 : vector<16x128xf32>
    %35 = arith.addf %31, %28 : vector<16x128xf32>
    %36 = arith.addf %35, %28 : vector<16x128xf32>
    %37 = arith.addf %36, %32 : vector<16x128xf32>
    %38 = math.absf %37 : vector<16x128xf32>
    %39 = arith.addf %34, %38 : vector<16x128xf32>
    %40 = arith.mulf %39, %5 : vector<16x128xf32>
    %c1_i32_16 = arith.constant 1 : i32
    %41 = tpu.dynamic_rotate %12 by %c1_i32_16 dim 0 : vector<16x128xf32>, i32 -> vector<16x128xf32>
    %c15_i32_17 = arith.constant 15 : i32
    %42 = tpu.dynamic_rotate %12 by %c15_i32_17 dim 0 : vector<16x128xf32>, i32 -> vector<16x128xf32>
    %c0_i32_18 = arith.constant 0 : i32
    %43 = vector.broadcast %c0_i32_18 : i32 to vector<16x128xi32>
    %44 = arith.cmpi sgt, %0, %43 : vector<16x128xi32>
    %cst_19 = arith.constant 0.000000e+00 : f32
    %45 = vector.broadcast %cst_19 : f32 to vector<16x128xf32>
    %46 = arith.select %44, %41, %45 : vector<16x128xi1>, vector<16x128xf32>
    %c15_i32_20 = arith.constant 15 : i32
    %47 = vector.broadcast %c15_i32_20 : i32 to vector<16x128xi32>
    %48 = arith.cmpi slt, %0, %47 : vector<16x128xi32>
    %cst_21 = arith.constant 0.000000e+00 : f32
    %49 = vector.broadcast %cst_21 : f32 to vector<16x128xf32>
    %50 = arith.select %48, %42, %49 : vector<16x128xi1>, vector<16x128xf32>
    %51 = arith.addf %46, %12 : vector<16x128xf32>
    %52 = arith.addf %51, %12 : vector<16x128xf32>
    %53 = arith.addf %52, %50 : vector<16x128xf32>
    %54 = arith.subf %46, %50 : vector<16x128xf32>
    %c1_i32_22 = arith.constant 1 : i32
    %55 = tpu.dynamic_rotate %53 by %c1_i32_22 dim 1 : vector<16x128xf32>, i32 -> vector<16x128xf32>
    %c127_i32_23 = arith.constant 127 : i32
    %56 = tpu.dynamic_rotate %53 by %c127_i32_23 dim 1 : vector<16x128xf32>, i32 -> vector<16x128xf32>
    %c1_i32_24 = arith.constant 1 : i32
    %57 = tpu.dynamic_rotate %54 by %c1_i32_24 dim 1 : vector<16x128xf32>, i32 -> vector<16x128xf32>
    %c127_i32_25 = arith.constant 127 : i32
    %58 = tpu.dynamic_rotate %54 by %c127_i32_25 dim 1 : vector<16x128xf32>, i32 -> vector<16x128xf32>
    %59 = arith.subf %56, %55 : vector<16x128xf32>
    %60 = math.absf %59 : vector<16x128xf32>
    %61 = arith.addf %57, %54 : vector<16x128xf32>
    %62 = arith.addf %61, %54 : vector<16x128xf32>
    %63 = arith.addf %62, %58 : vector<16x128xf32>
    %64 = math.absf %63 : vector<16x128xf32>
    %65 = arith.addf %60, %64 : vector<16x128xf32>
    %66 = arith.mulf %65, %5 : vector<16x128xf32>
    %67 = arith.subf %10, %12 : vector<16x128xf32>
    %68 = math.absf %67 : vector<16x128xf32>
    %cst_26 = arith.constant dense<0.000000e+00> : vector<128xf32>
    %69 = vector.multi_reduction <add>, %68, %cst_26 [0] : vector<16x128xf32> to vector<128xf32>
    %70 = vector.shape_cast %69 : vector<128xf32> to vector<1x128xf32>
    %71 = arith.addf %6, %70 : vector<1x128xf32>
    %72 = arith.subf %40, %66 : vector<16x128xf32>
    %73 = math.absf %72 : vector<16x128xf32>
    %cst_27 = arith.constant dense<0.000000e+00> : vector<128xf32>
    %74 = vector.multi_reduction <add>, %73, %cst_27 [0] : vector<16x128xf32> to vector<128xf32>
    %75 = vector.shape_cast %74 : vector<128xf32> to vector<1x128xf32>
    %76 = arith.addf %7, %75 : vector<1x128xf32>
    %77 = arith.subf %40, %14 : vector<16x128xf32>
    %78 = math.absf %77 : vector<16x128xf32>
    %cst_28 = arith.constant dense<0.000000e+00> : vector<128xf32>
    %79 = vector.multi_reduction <add>, %78, %cst_28 [0] : vector<16x128xf32> to vector<128xf32>
    %80 = vector.shape_cast %79 : vector<128xf32> to vector<1x128xf32>
    %81 = arith.addf %8, %80 : vector<1x128xf32>
    %c0_29 = arith.constant 0 : index
    %c0_30 = arith.constant 0 : index
    %c0_31 = arith.constant 0 : index
    %82 = vector.load %arg4[%c0_29, %c0_30, %c0_31] : memref<1x1x128xf32, #tpu.memory_space<vmem>>, vector<1x1x128xf32>
    %83 = vector.shape_cast %82 : vector<1x1x128xf32> to vector<1x128xf32>
    %84 = vector.shape_cast %71 : vector<1x128xf32> to vector<1x1x128xf32>
    tpu.vector_store %arg4[%c0_29, %c0_30, %c0_31], %84 {strides = array<i32>} : memref<1x1x128xf32, #tpu.memory_space<vmem>>, vector<1x1x128xf32>,
    %c0_32 = arith.constant 0 : index
    %c0_33 = arith.constant 0 : index
    %c0_34 = arith.constant 0 : index
    %85 = vector.load %arg5[%c0_32, %c0_33, %c0_34] : memref<1x1x128xf32, #tpu.memory_space<vmem>>, vector<1x1x128xf32>
    %86 = vector.shape_cast %85 : vector<1x1x128xf32> to vector<1x128xf32>
    %87 = vector.shape_cast %76 : vector<1x128xf32> to vector<1x1x128xf32>
    tpu.vector_store %arg5[%c0_32, %c0_33, %c0_34], %87 {strides = array<i32>} : memref<1x1x128xf32, #tpu.memory_space<vmem>>, vector<1x1x128xf32>,
    %c0_35 = arith.constant 0 : index
    %c0_36 = arith.constant 0 : index
    %c0_37 = arith.constant 0 : index
    %88 = vector.load %arg6[%c0_35, %c0_36, %c0_37] : memref<1x1x128xf32, #tpu.memory_space<vmem>>, vector<1x1x128xf32>
    %89 = vector.shape_cast %88 : vector<1x1x128xf32> to vector<1x128xf32>
    %90 = vector.shape_cast %81 : vector<1x128xf32> to vector<1x1x128xf32>
    tpu.vector_store %arg6[%c0_35, %c0_36, %c0_37], %90 {strides = array<i32>} : memref<1x1x128xf32, #tpu.memory_space<vmem>>, vector<1x1x128xf32>,
    return
  }
  func.func @transform_0(%arg0: i32) -> (i32, i32, i32) {
    %c0_i32 = arith.constant 0 : i32
    %c0_i32_0 = arith.constant 0 : i32
    %c0_i32_1 = arith.constant 0 : i32
    return %arg0, %c0_i32, %c0_i32_0 : i32, i32, i32
  }
  func.func @transform_1(%arg0: i32) -> (i32, i32, i32) {
    %c0_i32 = arith.constant 0 : i32
    %c0_i32_0 = arith.constant 0 : i32
    %c0_i32_1 = arith.constant 0 : i32
    return %arg0, %c0_i32, %c0_i32_0 : i32, i32, i32
  }
  func.func @transform_2(%arg0: i32) -> (i32, i32, i32) {
    %c0_i32 = arith.constant 0 : i32
    %c0_i32_0 = arith.constant 0 : i32
    %c0_i32_1 = arith.constant 0 : i32
    return %arg0, %c0_i32, %c0_i32_0 : i32, i32, i32
  }
  func.func @transform_3(%arg0: i32) -> (i32, i32, i32) {
    %c0_i32 = arith.constant 0 : i32
    %c0_i32_0 = arith.constant 0 : i32
    %c0_i32_1 = arith.constant 0 : i32
    return %arg0, %c0_i32, %c0_i32_0 : i32, i32, i32
  }
  func.func @transform_4(%arg0: i32) -> (i32, i32, i32) {
    %c0_i32 = arith.constant 0 : i32
    %c0_i32_0 = arith.constant 0 : i32
    %c0_i32_1 = arith.constant 0 : i32
    return %arg0, %c0_i32, %c0_i32_0 : i32, i32, i32
  }
  func.func @transform_5(%arg0: i32) -> (i32, i32, i32) {
    %c0_i32 = arith.constant 0 : i32
    %c0_i32_0 = arith.constant 0 : i32
    %c0_i32_1 = arith.constant 0 : i32
    return %arg0, %c0_i32, %c0_i32_0 : i32, i32, i32
  }
}

</mosaic_0001>

<llo_original>
// kernel: taylor_loss.1
$region0: #{taylor_loss.1}
  #allocation0 [shape = 'u32[]', space=smem, size = 0x4, offset = 0x4, fixed_abs, tag = 'smem constant byte address 0x4 - core index']
  #allocation1 [shape = 'u32[144,128]{1,0:T(1,128)}', space=vmem, size = 0x12000, scoped, tag = 'internal scratch']
  %s0 = inlined_call_operand.vmem [shape: f32[2,16,128], index: 0, kind: input, shape index: {}]
  %s1 = inlined_call_operand.vmem [shape: f32[2,16,128], index: 1, kind: input, shape index: {}]
  %s2 = inlined_call_operand.vmem [shape: f32[2,16,128], index: 2, kind: input, shape index: {}]
  %s3 = inlined_call_operand.vmem [shape: f32[2,1,128], index: 3, kind: output, shape index: {0}]
  %s4 = inlined_call_operand.vmem [shape: f32[2,1,128], index: 4, kind: output, shape index: {1}]
  %s5 = inlined_call_operand.vmem [shape: f32[2,1,128], index: 5, kind: output, shape index: {2}]
  %6 = xla_tuple %s3, %s4, %s5
  %s7 = sld [smem:[#allocation0]]
  $region61: #{taylor_loss.1} parent=0
    _
  %s9 = ssub.s32 1, %s7
  %s10 = scalar_select 0, %s9, %s7
  loop: start=0, step=1, limit=4
  $region2: #{taylor_loss.1} parent=0 // loop_pre_header
    _
  $region3: #{taylor_loss.1} parent=0 // loop_header
    %s12 = sphi 0, %s16
    %p13 = scmp.ge.s32.totalorder %s12, 4
    %s22 = sphi 0, %s24
    %s25 = sphi 0, %s22
    %s26 = sphi 0, %s25
    %s42 = sphi 0, %s26
    %s48 = sphi 0, %s50
    %s51 = sphi 0, %s48
    %s52 = sphi 0, %s51
    %s68 = sphi 0, %s52
    %s74 = sphi 0, %s76
    %s77 = sphi 0, %s74
    %s78 = sphi 0, %s77
    %s94 = sphi 0, %s78
    %s100 = sphi 0, %s102
    %s103 = sphi 0, %s100
    %s104 = sphi 0, %s103
    %s120 = sphi 0, %s104
    %s126 = sphi 0, %s128
    %s129 = sphi 0, %s126
    %s130 = sphi 0, %s129
    %s146 = sphi 0, %s130
    %s152 = sphi 0, %s154
    %s155 = sphi 0, %s152
    %s156 = sphi 0, %s155
    %s172 = sphi 0, %s156
  $region4: #{taylor_loss.1} parent=0 // loop_header_branch
    %15 = sbr.rel (%p13) target = $region8
  $region5: #{taylor_loss.1} parent=0 // loop_body
    %s17 = ssub.s32 %s12, 1
    %s18 = ssub.s32 %s12, 2
    %s19 = sadd.s32 %s12, 1
    %s20 = ssub.s32 %s12, %s19
    %p21 = scmp.eq.s32.totalorder %s20, 0
    %s23 = sadd.s32 %s22, 1
    %s24 = scalar_select %p21, %s22, %s23
    %p27 = pneg %p21
    %p28 = scmp.eq.s32.totalorder %s12, 1
    %p29 = por %p27, %p28
    %p30 = scmp.ne.s32.totalorder %s22, %s25
    %p31 = scmp.eq.s32.totalorder %s12, 0
    %p32 = por %p30, %p31
    %p33 = scmp.ne.s32.totalorder %s22, %s25
    %p34 = scmp.eq.s32.totalorder %s17, 1
    %p35 = por %p33, %p34
    %p36 = scmp.ne.s32.totalorder %s25, %s26
    %p37 = scmp.eq.s32.totalorder %s17, 0
    %p38 = por %p36, %p37
    %p39 = scmp.ne.s32.totalorder %s25, %s26
    %p40 = scmp.eq.s32.totalorder %s18, 1
    %p41 = por %p39, %p40
    %p43 = scmp.ne.s32.totalorder %s26, %s42
    %p44 = scmp.eq.s32.totalorder %s18, 0
    %p45 = por %p43, %p44
    %s46 = ssub.s32 %s12, %s19
    %p47 = scmp.eq.s32.totalorder %s46, 0
    %s49 = sadd.s32 %s48, 1
    %s50 = scalar_select %p47, %s48, %s49
    %p53 = pneg %p47
    %p54 = scmp.eq.s32.totalorder %s12, 1
    %p55 = por %p53, %p54
    %p56 = scmp.ne.s32.totalorder %s48, %s51
    %p57 = scmp.eq.s32.totalorder %s12, 0
    %p58 = por %p56, %p57
    %p59 = scmp.ne.s32.totalorder %s48, %s51
    %p60 = scmp.eq.s32.totalorder %s17, 1
    %p61 = por %p59, %p60
    %p62 = scmp.ne.s32.totalorder %s51, %s52
    %p63 = scmp.eq.s32.totalorder %s17, 0
    %p64 = por %p62, %p63
    %p65 = scmp.ne.s32.totalorder %s51, %s52
    %p66 = scmp.eq.s32.totalorder %s18, 1
    %p67 = por %p65, %p66
    %p69 = scmp.ne.s32.totalorder %s52, %s68
    %p70 = scmp.eq.s32.totalorder %s18, 0
    %p71 = por %p69, %p70
    %s72 = ssub.s32 %s12, %s19
    %p73 = scmp.eq.s32.totalorder %s72, 0
    %s75 = sadd.s32 %s74, 1
    %s76 = scalar_select %p73, %s74, %s75
    %p79 = pneg %p73
    %p80 = scmp.eq.s32.totalorder %s12, 1
    %p81 = por %p79, %p80
    %p82 = scmp.ne.s32.totalorder %s74, %s77
    %p83 = scmp.eq.s32.totalorder %s12, 0
    %p84 = por %p82, %p83
    %p85 = scmp.ne.s32.totalorder %s74, %s77
    %p86 = scmp.eq.s32.totalorder %s17, 1
    %p87 = por %p85, %p86
    %p88 = scmp.ne.s32.totalorder %s77, %s78
    %p89 = scmp.eq.s32.totalorder %s17, 0
    %p90 = por %p88, %p89
    %p91 = scmp.ne.s32.totalorder %s77, %s78
    %p92 = scmp.eq.s32.totalorder %s18, 1
    %p93 = por %p91, %p92
    %p95 = scmp.ne.s32.totalorder %s78, %s94
    %p96 = scmp.eq.s32.totalorder %s18, 0
    %p97 = por %p95, %p96
    %s98 = ssub.s32 %s12, %s19
    %p99 = scmp.eq.s32.totalorder %s98, 0
    %s101 = sadd.s32 %s100, 1
    %s102 = scalar_select %p99, %s100, %s101
    %p105 = pneg %p99
    %p106 = scmp.eq.s32.totalorder %s12, 1
    %p107 = por %p105, %p106
    %p108 = scmp.ne.s32.totalorder %s100, %s103
    %p109 = scmp.eq.s32.totalorder %s12, 0
    %p110 = por %p108, %p109
    %p111 = scmp.ne.s32.totalorder %s100, %s103
    %p112 = scmp.eq.s32.totalorder %s17, 1
    %p113 = por %p111, %p112
    %p114 = scmp.ne.s32.totalorder %s103, %s104
    %p115 = scmp.eq.s32.totalorder %s17, 0
    %p116 = por %p114, %p115
    %p117 = scmp.ne.s32.totalorder %s103, %s104
    %p118 = scmp.eq.s32.totalorder %s18, 1
    %p119 = por %p117, %p118
    %p121 = scmp.ne.s32.totalorder %s104, %s120
    %p122 = scmp.eq.s32.totalorder %s18, 0
    %p123 = por %p121, %p122
    %s124 = ssub.s32 %s12, %s19
    %p125 = scmp.eq.s32.totalorder %s124, 0
    %s127 = sadd.s32 %s126, 1
    %s128 = scalar_select %p125, %s126, %s127
    %p131 = pneg %p125
    %p132 = scmp.eq.s32.totalorder %s12, 1
    %p133 = por %p131, %p132
    %p134 = scmp.ne.s32.totalorder %s126, %s129
    %p135 = scmp.eq.s32.totalorder %s12, 0
    %p136 = por %p134, %p135
    %p137 = scmp.ne.s32.totalorder %s126, %s129
    %p138 = scmp.eq.s32.totalorder %s17, 1
    %p139 = por %p137, %p138
    %p140 = scmp.ne.s32.totalorder %s129, %s130
    %p141 = scmp.eq.s32.totalorder %s17, 0
    %p142 = por %p140, %p141
    %p143 = scmp.ne.s32.totalorder %s129, %s130
    %p144 = scmp.eq.s32.totalorder %s18, 1
    %p145 = por %p143, %p144
    %p147 = scmp.ne.s32.totalorder %s130, %s146
    %p148 = scmp.eq.s32.totalorder %s18, 0
    %p149 = por %p147, %p148
    %s150 = ssub.s32 %s12, %s19
    %p151 = scmp.eq.s32.totalorder %s150, 0
    %s153 = sadd.s32 %s152, 1
    %s154 = scalar_select %p151, %s152, %s153
    %p157 = pneg %p151
    %p158 = scmp.eq.s32.totalorder %s12, 1
    %p159 = por %p157, %p158
    %p160 = scmp.ne.s32.totalorder %s152, %s155
    %p161 = scmp.eq.s32.totalorder %s12, 0
    %p162 = por %p160, %p161
    %p163 = scmp.ne.s32.totalorder %s152, %s155
    %p164 = scmp.eq.s32.totalorder %s17, 1
    %p165 = por %p163, %p164
    %p166 = scmp.ne.s32.totalorder %s155, %s156
    %p167 = scmp.eq.s32.totalorder %s17, 0
    %p168 = por %p166, %p167
    %p169 = scmp.ne.s32.totalorder %s155, %s156
    %p170 = scmp.eq.s32.totalorder %s18, 1
    %p171 = por %p169, %p170
    %p173 = scmp.ne.s32.totalorder %s156, %s172
    %p174 = scmp.eq.s32.totalorder %s18, 0
    %p175 = por %p173, %p174
    %p176 = scmp.le.s32.totalorder 1, %s12
    %p177 = scmp.lt.s32.totalorder %s12, 3
    %p178 = pnand %p176, %p177
    %p179 = pneg %p178
    // Predicated region
    $region9: #{taylor_loss.1} parent=5 // pred_check
      _
    $region10: #{taylor_loss.1} parent=5 // pred_check_branch
      %181 = sbr.rel (%p178) target = $region12
    $region11: #{taylor_loss.1} parent=5 // pred_region
      %s182 = ssub.s32 %s12, 1
    $region12: #{taylor_loss.1} parent=5 // pred_fallthru
      _
    %p183 = scmp.lt.s32.totalorder %s12, 2
    // Predicated region
    $region13: #{taylor_loss.1} parent=5 // pred_check
      %p184 = pneg %p183
    $region14: #{taylor_loss.1} parent=5 // pred_check_branch
      %186 = sbr.rel (%p184) target = $region16
    $region15: #{taylor_loss.1} parent=5 // pred_region
      // Predicated region
      $region17: #{taylor_loss.1} parent=15 // pred_check
        %p187 = pneg %p32
      $region18: #{taylor_loss.1} parent=15 // pred_check_branch
        %189 = sbr.rel (%p187) target = $region20
      $region19: #{taylor_loss.1} parent=15 // pred_region
        %p190 = scmp.lt.s32.totalorder %s12, 1
        %s191 = scalar_select %p190, %s12, 1
        %s192 = smul.addr %s191, 2
        %s193 = smul.addr %s192, 8
        %s194 = scalar_lea.vmem %s0, %s193
      $region20: #{taylor_loss.1} parent=15 // pred_fallthru
        _
      // Predicated region
      $region21: #{taylor_loss.1} parent=15 // pred_check
        %p195 = pneg %p58
      $region22: #{taylor_loss.1} parent=15 // pred_check_branch
        %197 = sbr.rel (%p195) target = $region24
      $region23: #{taylor_loss.1} parent=15 // pred_region
        %p198 = scmp.lt.s32.totalorder %s12, 1
        %s199 = scalar_select %p198, %s12, 1
        %s200 = smul.addr %s199, 2
        %s201 = smul.addr %s200, 8
        %s202 = scalar_lea.vmem %s1, %s201
      $region24: #{taylor_loss.1} parent=15 // pred_fallthru
        _
      // Predicated region
      $region25: #{taylor_loss.1} parent=15 // pred_check
        %p203 = pneg %p84
      $region26: #{taylor_loss.1} parent=15 // pred_check_branch
        %205 = sbr.rel (%p203) target = $region28
      $region27: #{taylor_loss.1} parent=15 // pred_region
        %p206 = scmp.lt.s32.totalorder %s12, 1
        %s207 = scalar_select %p206, %s12, 1
        %s208 = smul.addr %s207, 2
        %s209 = smul.addr %s208, 8
        %s210 = scalar_lea.vmem %s2, %s209
      $region28: #{taylor_loss.1} parent=15 // pred_fallthru
        _
    $region16: #{taylor_loss.1} parent=5 // pred_fallthru
      _
    %p211 = scmp.le.s32.totalorder 1, %s12
    %p212 = scmp.lt.s32.totalorder %s12, 3
    %p213 = pnand %p211, %p212
    %p214 = pneg %p213
    // Predicated region
    $region29: #{taylor_loss.1} parent=5 // pred_check
      _
    $region30: #{taylor_loss.1} parent=5 // pred_check_branch
      %216 = sbr.rel (%p213) target = $region32
    $region31: #{taylor_loss.1} parent=5 // pred_region
      %s217 = ssub.s32 %s12, 1
      %p218 = scmp.lt.s32.totalorder %s17, 1
      %s219 = scalar_select %p218, %s17, 1
      %s220 = smul.addr %s219, 2
      %s221 = smul.addr %s220, 8
      %s222 = scalar_lea.vmem %s0, %s221
      %p223 = pneg %p38
      %p224 = pneg %p35
      %p225 = scmp.lt.s32.totalorder %s17, 1
      %s226 = scalar_select %p225, %s17, 1
      %s227 = smul.addr %s226, 2
      %s228 = smul.addr %s227, 8
      %s229 = scalar_lea.vmem %s1, %s228
      %p230 = pneg %p64
      %p231 = pneg %p61
      %p232 = scmp.lt.s32.totalorder %s17, 1
      %s233 = scalar_select %p232, %s17, 1
      %s234 = smul.addr %s233, 2
      %s235 = smul.addr %s234, 8
      %s236 = scalar_lea.vmem %s2, %s235
      %p237 = pneg %p90
      %p238 = pneg %p87
      %p239 = pneg %p116
      %p240 = pneg %p113
      %p241 = scmp.lt.s32.totalorder %s17, 1
      %s242 = scalar_select %p241, %s17, 1
      %s243 = scalar_lea.vmem %s3, %s242
      %p244 = pneg %p142
      %p245 = pneg %p139
      %p246 = scmp.lt.s32.totalorder %s17, 1
      %s247 = scalar_select %p246, %s17, 1
      %s248 = scalar_lea.vmem %s4, %s247
      %p249 = pneg %p168
      %p250 = pneg %p165
      %p251 = scmp.lt.s32.totalorder %s17, 1
      %s252 = scalar_select %p251, %s17, 1
      %s253 = scalar_lea.vmem %s5, %s252
      %p254 = scmp.lt.s32.totalorder %s17, 1
      %s255 = scalar_select %p254, %s17, 1
      %s256 = smul.addr %s255, 2
      %s257 = smul.addr %s256, 8
      %s258 = scalar_lea.vmem %s0, %s257
      %p259 = scmp.lt.s32.totalorder %s17, 1
      %s260 = scalar_select %p259, %s17, 1
      %s261 = smul.addr %s260, 2
      %s262 = smul.addr %s261, 8
      %s263 = scalar_lea.vmem %s1, %s262
      %p264 = scmp.lt.s32.totalorder %s17, 1
      %s265 = scalar_select %p264, %s17, 1
      %s266 = smul.addr %s265, 2
      %s267 = smul.addr %s266, 8
      %s268 = scalar_lea.vmem %s2, %s267
      %p269 = scmp.lt.s32.totalorder %s17, 1
      %s270 = scalar_select %p269, %s17, 1
      %s271 = scalar_lea.vmem %s3, %s270
      %p272 = scmp.lt.s32.totalorder %s17, 1
      %s273 = scalar_select %p272, %s17, 1
      %s274 = scalar_lea.vmem %s4, %s273
      %p275 = scmp.lt.s32.totalorder %s17, 1
      %s276 = scalar_select %p275, %s17, 1
      %s277 = scalar_lea.vmem %s5, %s276
      %v278 = vlaneseq
      %v279 = vshrl.u32 %v278, 7
      %v280 = vadd.s32 %v279, 8
      %v281 = vlaneseq
      %v282 = vand.u32 %v281, 127
      %vm283 = vcmp.lt.s32.totalorder %v282, 16
      %v284 = vsel %vm283, 1, 0
      %v285 = vcvt.s32.f32 %v284
      %v286 = vld [vmem:[%s258] sm:$0xff]
      %v287 = vld [vmem:[%s258 + $0x8] sm:$0xff]
      %v288 = vld [vmem:[%s263] sm:$0xff]
      %v289 = vld [vmem:[%s263 + $0x8] sm:$0xff]
      %v290 = vld [vmem:[%s268] sm:$0xff]
      %v291 = vld [vmem:[%s268 + $0x8] sm:$0xff]
      %v292 = vrot.slane %v286, 7
      %v293 = vrot.slane %v287, 7
      %vm294 = vcmp.lt.s32.totalorder %v279, 1
      %v295 = vsel %vm294, %v292, %v293
      %v296 = vsel %vm294, %v293, %v292
      %v297 = vrot.slane %v286, 1
      %v298 = vrot.slane %v287, 1
      %vm299 = vcmp.lt.s32.totalorder %v279, 7
      %v300 = vsel %vm299, %v297, %v298
      %v301 = vsel %vm299, %v298, %v297
      %vm302 = vcmp.gt.s32.totalorder %v279, 0
      %vm303 = vcmp.gt.s32.totalorder %v280, 0
      %v304 = vsel %vm302, %v296, 0.0
      %v305 = vsel %vm303, %v295, 0.0
      %vm306 = vcmp.lt.s32.totalorder %v279, 15
      %vm307 = vcmp.lt.s32.totalorder %v280, 15
      %v308 = vsel %vm306, %v300, 0.0
      %v309 = vsel %vm307, %v301, 0.0
      %v310 = vadd.f32 %v304, %v286
      %v311 = vadd.f32 %v305, %v287
      %v312 = vadd.f32 %v310, %v286
      %v313 = vadd.f32 %v311, %v287
      %v314 = vadd.f32 %v312, %v308
      %v315 = vadd.f32 %v313, %v309
      %v316 = vsub.f32 %v304, %v308
      %v317 = vsub.f32 %v305, %v309
      %318 = vrot.lane.b32.xlu0 %v314, 1
      %v319 = vpop.permute.xlu0 %318
      %320 = vrot.lane.b32.xlu0 %v315, 1
      %v321 = vpop.permute.xlu0 %320
      %322 = vrot.lane.b32.xlu0 %v314, 127
      %v323 = vpop.permute.xlu0 %322
      %324 = vrot.lane.b32.xlu0 %v315, 127
      %v325 = vpop.permute.xlu0 %324
      %326 = vrot.lane.b32.xlu0 %v316, 1
      %v327 = vpop.permute.xlu0 %326
      %328 = vrot.lane.b32.xlu0 %v317, 1
      %v329 = vpop.permute.xlu0 %328
      %330 = vrot.lane.b32.xlu0 %v316, 127
      %v331 = vpop.permute.xlu0 %330
      %332 = vrot.lane.b32.xlu0 %v317, 127
      %v333 = vpop.permute.xlu0 %332
      %v334 = vsub.f32 %v323, %v319
      %v335 = vsub.f32 %v325, %v321
      %v336 = vand.u32 2147483647, %v334
      %v337 = vand.u32 2147483647, %v335
      %v338 = vadd.f32 %v327, %v316
      %v339 = vadd.f32 %v329, %v317
      %v340 = vadd.f32 %v338, %v316
      %v341 = vadd.f32 %v339, %v317
      %v342 = vadd.f32 %v340, %v331
      %v343 = vadd.f32 %v341, %v333
      %v344 = vand.u32 2147483647, %v342
      %v345 = vand.u32 2147483647, %v343
      %v346 = vadd.f32 %v336, %v344
      %v347 = vadd.f32 %v337, %v345
      %v348 = vmul.f32 %v346, %v285
      %v349 = vmul.f32 %v347, %v285
      %v350 = vrot.slane %v288, 7
      %v351 = vrot.slane %v289, 7
      %v352 = vsel %vm294, %v350, %v351
      %v353 = vsel %vm294, %v351, %v350
      %v354 = vrot.slane %v288, 1
      %v355 = vrot.slane %v289, 1
      %v356 = vsel %vm299, %v354, %v355
      %v357 = vsel %vm299, %v355, %v354
      %v358 = vsel %vm302, %v353, 0.0
      %v359 = vsel %vm303, %v352, 0.0
      %v360 = vsel %vm306, %v356, 0.0
      %v361 = vsel %vm307, %v357, 0.0
      %v362 = vadd.f32 %v358, %v288
      %v363 = vadd.f32 %v359, %v289
      %v364 = vadd.f32 %v362, %v288
      %v365 = vadd.f32 %v363, %v289
      %v366 = vadd.f32 %v364, %v360
      %v367 = vadd.f32 %v365, %v361
      %v368 = vsub.f32 %v358, %v360
      %v369 = vsub.f32 %v359, %v361
      %370 = vrot.lane.b32.xlu0 %v366, 1
      %v371 = vpop.permute.xlu0 %370
      %372 = vrot.lane.b32.xlu0 %v367, 1
      %v373 = vpop.permute.xlu0 %372
      %374 = vrot.lane.b32.xlu0 %v366, 127
      %v375 = vpop.permute.xlu0 %374
      %376 = vrot.lane.b32.xlu0 %v367, 127
      %v377 = vpop.permute.xlu0 %376
      %378 = vrot.lane.b32.xlu0 %v368, 1
      %v379 = vpop.permute.xlu0 %378
      %380 = vrot.lane.b32.xlu0 %v369, 1
      %v381 = vpop.permute.xlu0 %380
      %382 = vrot.lane.b32.xlu0 %v368, 127
      %v383 = vpop.permute.xlu0 %382
      %384 = vrot.lane.b32.xlu0 %v369, 127
      %v385 = vpop.permute.xlu0 %384
      %v386 = vsub.f32 %v375, %v371
      %v387 = vsub.f32 %v377, %v373
      %v388 = vand.u32 2147483647, %v386
      %v389 = vand.u32 2147483647, %v387
      %v390 = vadd.f32 %v379, %v368
      %v391 = vadd.f32 %v381, %v369
      %v392 = vadd.f32 %v390, %v368
      %v393 = vadd.f32 %v391, %v369
      %v394 = vadd.f32 %v392, %v383
      %v395 = vadd.f32 %v393, %v385
      %v396 = vand.u32 2147483647, %v394
      %v397 = vand.u32 2147483647, %v395
      %v398 = vadd.f32 %v388, %v396
      %v399 = vadd.f32 %v389, %v397
      %v400 = vmul.f32 %v398, %v285
      %v401 = vmul.f32 %v399, %v285
      %v402 = vsub.f32 %v286, %v288
      %v403 = vsub.f32 %v287, %v289
      %v404 = vand.u32 2147483647, %v402
      %v405 = vand.u32 2147483647, %v403
      %v406 = vadd.f32 %v404, %v405
      %v407 = vrot.slane %v406, 4
      %v408 = vadd.f32 %v406, %v407
      %v409 = vrot.slane %v408, 2
      %v410 = vadd.f32 %v408, %v409
      %v411 = vrot.slane %v410, 1
      %v412 = vadd.f32 %v410, %v411
      %v413 = vadd.f32 %v412, 0.0
      %v414 = vsub.f32 %v348, %v400
      %v415 = vsub.f32 %v349, %v401
      %v416 = vand.u32 2147483647, %v414
      %v417 = vand.u32 2147483647, %v415
      %v418 = vadd.f32 %v416, %v417
      %v419 = vrot.slane %v418, 4
      %v420 = vadd.f32 %v418, %v419
      %v421 = vrot.slane %v420, 2
      %v422 = vadd.f32 %v420, %v421
      %v423 = vrot.slane %v422, 1
      %v424 = vadd.f32 %v422, %v423
      %v425 = vadd.f32 %v424, 0.0
      %v426 = vsub.f32 %v348, %v290
      %v427 = vsub.f32 %v349, %v291
      %v428 = vand.u32 2147483647, %v426
      %v429 = vand.u32 2147483647, %v427
      %v430 = vadd.f32 %v428, %v429
      %v431 = vrot.slane %v430, 4
      %v432 = vadd.f32 %v430, %v431
      %v433 = vrot.slane %v432, 2
      %v434 = vadd.f32 %v432, %v433
      %v435 = vrot.slane %v434, 1
      %v436 = vadd.f32 %v434, %v435
      %v437 = vadd.f32 %v436, 0.0
      %438 = vst [vmem:[%s271] sm:$0x1] %v413
      %439 = vst [vmem:[%s274] sm:$0x1] %v425
      %440 = vst [vmem:[%s277] sm:$0x1] %v437
      %p441 = scmp.lt.s32.totalorder %s17, 1
      %s442 = scalar_select %p441, %s17, 1
      %s443 = scalar_lea.vmem %s3, %s442
      %p444 = scmp.lt.s32.totalorder %s17, 1
      %s445 = scalar_select %p444, %s17, 1
      %s446 = scalar_lea.vmem %s4, %s445
      %p447 = scmp.lt.s32.totalorder %s17, 1
      %s448 = scalar_select %p447, %s17, 1
      %s449 = scalar_lea.vmem %s5, %s448
      // Predicated region
      $region33: #{taylor_loss.1} parent=31 // pred_check
        %p450 = pneg %p113
      $region34: #{taylor_loss.1} parent=31 // pred_check_branch
        %452 = sbr.rel (%p450) target = $region36
      $region35: #{taylor_loss.1} parent=31 // pred_region
        _
      $region36: #{taylor_loss.1} parent=31 // pred_fallthru
        _
      // Predicated region
      $region37: #{taylor_loss.1} parent=31 // pred_check
        %p453 = pneg %p139
      $region38: #{taylor_loss.1} parent=31 // pred_check_branch
        %455 = sbr.rel (%p453) target = $region40
      $region39: #{taylor_loss.1} parent=31 // pred_region
        _
      $region40: #{taylor_loss.1} parent=31 // pred_fallthru
        _
      // Predicated region
      $region41: #{taylor_loss.1} parent=31 // pred_check
        %p456 = pneg %p165
      $region42: #{taylor_loss.1} parent=31 // pred_check_branch
        %458 = sbr.rel (%p456) target = $region44
      $region43: #{taylor_loss.1} parent=31 // pred_region
        _
      $region44: #{taylor_loss.1} parent=31 // pred_fallthru
        _
    $region32: #{taylor_loss.1} parent=5 // pred_fallthru
      _
    %p459 = scmp.le.s32.totalorder 2, %s12
    // Predicated region
    $region45: #{taylor_loss.1} parent=5 // pred_check
      %p460 = pneg %p459
    $region46: #{taylor_loss.1} parent=5 // pred_check_branch
      %462 = sbr.rel (%p460) target = $region48
    $region47: #{taylor_loss.1} parent=5 // pred_region
      %s463 = ssub.s32 %s12, 2
      // Predicated region
      $region49: #{taylor_loss.1} parent=47 // pred_check
        %p464 = pneg %p119
      $region50: #{taylor_loss.1} parent=47 // pred_check_branch
        %466 = sbr.rel (%p464) target = $region52
      $region51: #{taylor_loss.1} parent=47 // pred_region
        %p467 = scmp.lt.s32.totalorder %s18, 1
        %s468 = scalar_select %p467, %s18, 1
        %s469 = scalar_lea.vmem %s3, %s468
      $region52: #{taylor_loss.1} parent=47 // pred_fallthru
        _
      // Predicated region
      $region53: #{taylor_loss.1} parent=47 // pred_check
        %p470 = pneg %p145
      $region54: #{taylor_loss.1} parent=47 // pred_check_branch
        %472 = sbr.rel (%p470) target = $region56
      $region55: #{taylor_loss.1} parent=47 // pred_region
        %p473 = scmp.lt.s32.totalorder %s18, 1
        %s474 = scalar_select %p473, %s18, 1
        %s475 = scalar_lea.vmem %s4, %s474
      $region56: #{taylor_loss.1} parent=47 // pred_fallthru
        _
      // Predicated region
      $region57: #{taylor_loss.1} parent=47 // pred_check
        %p476 = pneg %p171
      $region58: #{taylor_loss.1} parent=47 // pred_check_branch
        %478 = sbr.rel (%p476) target = $region60
      $region59: #{taylor_loss.1} parent=47 // pred_region
        %p479 = scmp.lt.s32.totalorder %s18, 1
        %s480 = scalar_select %p479, %s18, 1
        %s481 = scalar_lea.vmem %s5, %s480
      $region60: #{taylor_loss.1} parent=47 // pred_fallthru
        _
    $region48: #{taylor_loss.1} parent=5 // pred_fallthru
      _
  $region6: #{taylor_loss.1} parent=0 // loop_footer
    %s16 = sadd.s32 1, %s12
  $region7: #{taylor_loss.1} parent=0 // loop_footer_branch
    %11 = sbr.rel target = $region3
  $region8: #{taylor_loss.1} parent=0 // loop_exit
    _

</llo_original>
